<compile_context>
chip_gen: v6e
topology: v6e:2x2x1
jax: 0.10.0
libtpu: 0.0.40
codegen_flags: <defaults>
</compile_context>

<pallas_src>
import math

import numpy as np
import jax
import jax.numpy as jnp
from jax import lax
from jax.experimental import pallas as pl
from jax.experimental.pallas import tpu as pltpu


# ---------------------------------------------------------------------------
# VMEM budget / tiling helpers
# ---------------------------------------------------------------------------
def _vmem_limit_bytes():
    try:
        cap = int(pltpu.get_tpu_info().vmem_capacity_bytes)
    except Exception:
        cap = 64 * 1024 * 1024          # conservative (v7x per-TC capacity)
    # half of physical capacity, but never below v5e's 16 MiB default scoped
    # limit and never above 64 MiB.
    return max(32 * 1024 * 1024, min(cap // 2, 64 * 1024 * 1024))


_VMEM_LIMIT = _vmem_limit_bytes()


def _cparams():
    return pltpu.CompilerParams(
        dimension_semantics=("parallel",),
        vmem_limit_bytes=_VMEM_LIMIT,
    )


def _block_rows(n_rows, n_cols, n_streams, fixed_bytes=0):
    """Row tile: largest multiple of 8 keeping the double-buffered working set
    within ~40% of the scoped VMEM limit; split small arrays into >=2 blocks
    so v7x's two TensorCores can both be used (neutral on v5e/v6e)."""
    budget = max(int(_VMEM_LIMIT * 0.4) - int(fixed_bytes), 1 << 20)
    bytes_per_row = 4 * max(int(n_cols), 1) * n_streams * 2      # f32, 2x buf
    br = budget // bytes_per_row
    br = max(8, min(int(br), 4096))
    br = (br // 8) * 8
    if n_rows <= br:
        if n_rows >= 16:
            half = ((n_rows + 1) // 2 + 7) // 8 * 8
            if half < n_rows:
                return int(half)
        return int(n_rows)              # full extent -> always a legal block
    return int(br)


def _pack_factor(c, hw):
    """Smallest g with (g*c) % 128 == 0 (lane-dense packing); require g | H*W
    so packed rows never cross a batch element (per-batch logdet stays exact)."""
    g = 128 // math.gcd(int(c), 128)
    if g > 1 and hw % g == 0:
        return int(g)
    return 1


# ---------------------------------------------------------------------------
# Pallas kernels (rows on sublanes, lane-packed channels on the 128-lane axis)
# ---------------------------------------------------------------------------
def _an_matmul_kernel(x_ref, w_ref, b_ref, o_ref):
    # Fused Actnorm + invertible 1x1 conv:  y = x @ Wf + bias_row
    o_ref[...] = (
        jnp.dot(x_ref[...].astype(jnp.float32), w_ref[...],
                preferred_element_type=jnp.float32)
        + b_ref[...]
    ).astype(o_ref.dtype)


def _coupling_kernel(xa_ref, t_ref, s_ref, za_ref, ld_ref):
    u = s_ref[...].astype(jnp.float32) + 2.0
    # log s = log sigmoid(u) = -softplus(-u): finite for all u (no -inf).
    log_s = -(jnp.maximum(-u, 0.0) + jnp.log(1.0 + jnp.exp(-jnp.abs(u))))
    s = jnp.exp(log_s)
    za_ref[...] = (s * xa_ref[...].astype(jnp.float32)
                   + t_ref[...].astype(jnp.float32)).astype(za_ref.dtype)
    ld_ref[...] = jnp.sum(log_s, axis=-1, keepdims=True)          # f32 accum


def _gaussianize_kernel(x2_ref, m_ref, l_ref, z2_ref, ld_ref):
    logs = l_ref[...].astype(jnp.float32)
    z2 = (x2_ref[...].astype(jnp.float32)
          - m_ref[...].astype(jnp.float32)) * jnp.exp(-logs)
    z2_ref[...] = z2.astype(z2_ref.dtype)
    ld_ref[...] = -jnp.sum(logs, axis=-1, keepdims=True)          # f32 accum


# ---------------------------------------------------------------------------
# Pallas wrappers
# ---------------------------------------------------------------------------
def _an_matmul_call(x_nc, wt_fused, bias_row, g):
    """y[n,o] = sum_c (x[n,c]-mean[c])*inv_std[c]*W[o,c]  (actnorm + 1x1 conv),
    with the per-channel affine folded into (wt_fused, bias_row)."""
    n, c = x_nc.shape
    co = wt_fused.shape[1]
    if g > 1:
        x_p = x_nc.reshape(n // g, g * c)
        # block-diagonal weight: each packed group of c lanes only mixes with
        # itself; MXU absorbs the larger (lane-dense) tile for free.
        w_p = jnp.kron(jnp.eye(g, dtype=wt_fused.dtype), wt_fused)
        b_p = jnp.tile(bias_row, (1, g))
    else:
        x_p, w_p, b_p = x_nc, wt_fused, bias_row
    np_, gi = x_p.shape
    go = w_p.shape[1]
    br = _block_rows(np_, max(gi, go), 2, fixed_bytes=8 * gi * go)
    out = pl.pallas_call(
        _an_matmul_kernel,
        out_shape=jax.ShapeDtypeStruct((np_, go), x_nc.dtype),
        grid=(pl.cdiv(np_, br),),
        in_specs=[
            pl.BlockSpec((br, gi), lambda i: (i, 0)),
            pl.BlockSpec((gi, go), lambda i: (0, 0)),     # resident weight
            pl.BlockSpec((1, go), lambda i: (0, 0)),
        ],
        out_specs=pl.BlockSpec((br, go), lambda i: (i, 0)),
        compiler_params=_cparams(),
    )(x_p, w_p, b_p)
    return out.reshape(n, co)


def _coupling_call(xa_nc, t_nc, s_nc, g):
    n, ch = xa_nc.shape
    np_ = n // g
    G = g * ch
    xa_p = xa_nc.reshape(np_, G)
    t_p = t_nc.reshape(np_, G)
    s_p = s_nc.reshape(np_, G)
    br = _block_rows(np_, G, 5)
    za_p, ld = pl.pallas_call(
        _coupling_kernel,
        out_shape=(jax.ShapeDtypeStruct((np_, G), xa_nc.dtype),
                   jax.ShapeDtypeStruct((np_, 1), jnp.float32)),
        grid=(pl.cdiv(np_, br),),
        in_specs=[pl.BlockSpec((br, G), lambda i: (i, 0))] * 3,
        out_specs=(pl.BlockSpec((br, G), lambda i: (i, 0)),
                   pl.BlockSpec((br, 1), lambda i: (i, 0))),
        compiler_params=_cparams(),
    )(xa_p, t_p, s_p)
    return za_p.reshape(n, ch), ld


def _gaussianize_call(x2_nc, m_nc, l_nc, g):
    n, ch = x2_nc.shape
    np_ = n // g
    G = g * ch
    x2_p = x2_nc.reshape(np_, G)
    m_p = m_nc.reshape(np_, G)
    l_p = l_nc.reshape(np_, G)
    br = _block_rows(np_, G, 5)
    z2_p, ld = pl.pallas_call(
        _gaussianize_kernel,
        out_shape=(jax.ShapeDtypeStruct((np_, G), x2_nc.dtype),
                   jax.ShapeDtypeStruct((np_, 1), jnp.float32)),
        grid=(pl.cdiv(np_, br),),
        in_specs=[pl.BlockSpec((br, G), lambda i: (i, 0))] * 3,
        out_specs=(pl.BlockSpec((br, G), lambda i: (i, 0)),
                   pl.BlockSpec((br, 1), lambda i: (i, 0))),
        compiler_params=_cparams(),
    )(x2_p, m_p, l_p)
    return z2_p.reshape(n, ch), ld


# ---------------------------------------------------------------------------
# Module pieces (NHWC internally; channels on the lane axis)
# ---------------------------------------------------------------------------
def _conv_nhwc(x, w_oihw, bias, padding):
    # TODO(synk): 3x3 / padded convolutions left to XLA (lax.conv); no clean
    # single Pallas kernel equivalent here.
    w_hwio = jnp.transpose(w_oihw, (2, 3, 1, 0))
    out = lax.conv_general_dilated(
        x, w_hwio, window_strides=(1, 1), padding=padding,
        dimension_numbers=("NHWC", "HWIO", "NHWC"))
    if bias is not None:
        out = out + bias.reshape(1, 1, 1, -1)
    return out


def _actnorm_relu_xla(h):
    """Coupling-net Actnorm (fresh data-dependent init) + ReLU, in plain jnp so
    XLA fuses the per-channel affine into the adjacent conv epilogue."""
    mean = jnp.mean(h, axis=(0, 1, 2))
    var = jnp.mean(jnp.square(h - mean), axis=(0, 1, 2))
    inv_std = 1.0 / (jnp.sqrt(var) + 1e-6)
    return jnp.maximum((h - mean) * inv_std, 0.0)


def _head_perm(c_out):
    # output-channel permutation turning the interleaved 0::2 / 1::2 head into
    # two contiguous halves [even | odd].
    return np.concatenate([np.arange(0, c_out, 2), np.arange(1, c_out, 2)])


def flow_step_forward(sp, x):
    """Actnorm -> Invertible1x1Conv (fused Pallas matmul) -> AffineCoupling."""
    B, Hs, Ws, c4 = x.shape
    HW = Hs * Ws
    N = B * HW

    # Actnorm data-dependent init stats, folded into the 1x1-conv weight.
    mean = jnp.mean(x, axis=(0, 1, 2))
    var = jnp.mean(jnp.square(x - mean), axis=(0, 1, 2))
    std = jnp.sqrt(var) + 1e-6
    inv_s = 1.0 / std
    ld_actnorm = -jnp.sum(jnp.log(jnp.abs(std))) * HW              # scalar

    w = sp["inv_w"]
    wt_fused = w.T * inv_s[:, None]                                # (c4, c4)
    bias_row = -((mean * inv_s)[None, :] @ w.T)                    # (1, c4)
    # TODO(synk): slogdet (LU factorization) has no Pallas equivalent.
    ld_w = jnp.linalg.slogdet(w)[1] * HW

    g = _pack_factor(c4, HW)
    y = _an_matmul_call(x.reshape(N, c4), wt_fused, bias_row, g)
    y = y.reshape(B, Hs, Ws, c4)

    z, ld_coupling = affine_coupling_forward(sp["coupling"], y)
    return z, ld_actnorm + ld_w + ld_coupling


def affine_coupling_forward(cp, x):
    B, Hs, Ws, c4 = x.shape
    ch = c4 // 2
    x_a, x_b = x[..., :ch], x[..., ch:]

    h = _conv_nhwc(x_b, cp["conv1_w"], None, ((1, 1), (1, 1)))
    h = _actnorm_relu_xla(h)                              # actnorm1 + ReLU
    h = _conv_nhwc(h, cp["conv2_w"], None, ((1, 1), (1, 1)))   # 1x1 kernel, pad 1
    h = _actnorm_relu_xla(h)                              # actnorm2 + ReLU

    # Fold exp(log_scale_factor) + the [t|s] de-interleave into conv3.
    perm = _head_perm(c4)
    scale = jnp.exp(cp["lsf"])[perm]
    w3 = cp["conv3_w"][perm] * scale[:, None, None, None]
    b3 = cp["conv3_b"][perm] * scale
    h = _conv_nhwc(h, w3, b3, ((0, 0), (0, 0)))           # channels = [t | s]

    t_raw, s_raw = h[..., :ch], h[..., ch:]
    N = B * Hs * Ws
    g = _pack_factor(ch, Hs * Ws)
    z_a_nc, ld_rows = _coupling_call(
        x_a.reshape(N, ch), t_raw.reshape(N, ch), s_raw.reshape(N, ch), g)
    z = jnp.concatenate([z_a_nc.reshape(B, Hs, Ws, ch), x_b], axis=-1)
    logdet = jnp.sum(ld_rows.reshape(B, -1), axis=1)      # (B,) f32
    return z, logdet


def gaussianize_forward(gp, x1, x2):
    B, Hs, Ws, cg = x2.shape
    perm = _head_perm(2 * cg)
    scale = jnp.exp(gp["lsf"])[perm]
    wn = gp["net_w"][perm] * scale[:, None, None, None]
    bn = gp["net_b"][perm] * scale
    h = _conv_nhwc(x1, wn, bn, ((1, 1), (1, 1)))          # channels = [m | logs]

    m_raw, l_raw = h[..., :cg], h[..., cg:]
    N = B * Hs * Ws
    g = _pack_factor(cg, Hs * Ws)
    z2_nc, ld_rows = _gaussianize_call(
        x2.reshape(N, cg), m_raw.reshape(N, cg), l_raw.reshape(N, cg), g)
    z2 = z2_nc.reshape(B, Hs, Ws, cg)
    logdet = jnp.sum(ld_rows.reshape(B, -1), axis=1)      # (B,) f32
    return z2, logdet


def flow_level_forward(params, x_nchw):
    # Squeeze (pure layout op, left to XLA), then NCHW -> NHWC.
    B, C, H, W = x_nchw.shape
    x = x_nchw.reshape(B, C, H // 2, 2, W // 2, 2)
    x = jnp.transpose(x, (0, 1, 3, 5, 2, 4)).reshape(B, 4 * C, H // 2, W // 2)
    x = jnp.transpose(x, (0, 2, 3, 1))

    sum_ld = jnp.zeros((B,), jnp.float32)
    for sp in params["flowsteps"]:
        x, ld = flow_step_forward(sp, x)
        sum_ld = sum_ld + ld

    c4 = x.shape[-1]
    x1, x2 = x[..., : c4 // 2], x[..., c4 // 2:]
    z2, ld = gaussianize_forward(params["split"], x1, x2)
    sum_ld = sum_ld + ld

    # back to NCHW to match the PyTorch interface
    return (jnp.transpose(x1, (0, 3, 1, 2)),
            jnp.transpose(z2, (0, 3, 1, 2)),
            sum_ld)


# ---------------------------------------------------------------------------
# Parameter init (matches the PyTorch module's construction)
# ---------------------------------------------------------------------------
def init_flow_level_params(key, n_channels, width, depth):
    c4 = 4 * n_channels
    params = {"flowsteps": [], "split": None}
    for _ in range(depth):
        key, k1, k2, k3 = jax.random.split(key, 4)
        # TODO(synk): QR orthogonal init left to jnp.linalg.
        w = jnp.linalg.qr(jax.random.normal(k1, (c4, c4), jnp.float32))[0]
        b1 = 1.0 / jnp.sqrt((c4 // 2) * 9.0)
        conv1_w = jax.random.uniform(k2, (width, c4 // 2, 3, 3), jnp.float32, -b1, b1)
        b2 = 1.0 / jnp.sqrt(float(width))
        conv2_w = jax.random.uniform(k3, (width, width, 1, 1), jnp.float32, -b2, b2)
        params["flowsteps"].append({
            "inv_w": w,
            "coupling": {
                "conv1_w": conv1_w,
                "conv2_w": conv2_w,
                "conv3_w": jnp.zeros((c4, width, 3, 3), jnp.float32),
                "conv3_b": jnp.zeros((c4,), jnp.float32),
                "lsf": jnp.zeros((c4,), jnp.float32),
            },
        })
    cg = c4 // 2
    params["split"] = {
        "net_w": jnp.zeros((2 * cg, cg, 3, 3), jnp.float32),
        "net_b": jnp.zeros((2 * cg,), jnp.float32),
        "lsf": jnp.zeros((2 * cg,), jnp.float32),
    }
    return params


# ---------------------------------------------------------------------------
# Pure-JAX (NCHW) reference of the PyTorch semantics, for validation
# ---------------------------------------------------------------------------
def _ref_conv_nchw(x, w, b, padding):
    out = lax.conv_general_dilated(
        x, w, (1, 1), padding, dimension_numbers=("NCHW", "OIHW", "NCHW"))
    if b is not None:
        out = out + b.reshape(1, -1, 1, 1)
    return out


def _ref_actnorm_norm(x):
    mean = jnp.mean(x, axis=(0, 2, 3), keepdims=True)
    std = jnp.std(x, axis=(0, 2, 3), keepdims=True) + 1e-6
    return (x - mean) / std, std


def _ref_flow_level(params, x):
    B, C, H, W = x.shape
    x = x.reshape(B, C, H // 2, 2, W // 2, 2)
    x = jnp.transpose(x, (0, 1, 3, 5, 2, 4)).reshape(B, 4 * C, H // 2, W // 2)
    sum_ld = jnp.zeros((B,), jnp.float32)
    for sp in params["flowsteps"]:
        hs, ws = x.shape[2], x.shape[3]
        x, std = _ref_actnorm_norm(x)
        sum_ld = sum_ld - jnp.sum(jnp.log(jnp.abs(std))) * hs * ws
        w = sp["inv_w"]
        x = _ref_conv_nchw(x, w.reshape(*w.shape, 1, 1), None, ((0, 0), (0, 0)))
        sum_ld = sum_ld + jnp.linalg.slogdet(w)[1] * hs * ws
        cp = sp["coupling"]
        ca = x.shape[1] // 2
        x_a, x_b = x[:, :ca], x[:, ca:]
        h = _ref_conv_nchw(x_b, cp["conv1_w"], None, ((1, 1), (1, 1)))
        h = jax.nn.relu(_ref_actnorm_norm(h)[0])
        h = _ref_conv_nchw(h, cp["conv2_w"], None, ((1, 1), (1, 1)))
        h = jax.nn.relu(_ref_actnorm_norm(h)[0])
        h = _ref_conv_nchw(h, cp["conv3_w"], cp["conv3_b"], ((0, 0), (0, 0)))
        h = h * jnp.exp(cp["lsf"]).reshape(1, -1, 1, 1)
        t = h[:, 0::2]
        s = jax.nn.sigmoid(h[:, 1::2] + 2.0)
        x = jnp.concatenate([s * x_a + t, x_b], axis=1)
        sum_ld = sum_ld + jnp.sum(jnp.log(s), axis=(1, 2, 3))
    ca = x.shape[1] // 2
    x1, x2 = x[:, :ca], x[:, ca:]
    g = params["split"]
    h = _ref_conv_nchw(x1, g["net_w"], g["net_b"], ((1, 1), (1, 1)))
    h = h * jnp.exp(g["lsf"]).reshape(1, -1, 1, 1)
    m, logs = h[:, 0::2], h[:, 1::2]
    z2 = (x2 - m) * jnp.exp(-logs)
    sum_ld = sum_ld - jnp.sum(logs, axis=(1, 2, 3))
    return x1, z2, sum_ld


# ---------------------------------------------------------------------------
# Demo / correctness check
# ---------------------------------------------------------------------------
if __name__ == "__main__":
    key = jax.random.PRNGKey(0)
    kx, kp = jax.random.split(key)

    B, C, H, W = 2, 4, 16, 16        # small NCHW image input
    width, depth = 32, 2             # coupling-net width, # flow steps

    x = jax.random.normal(kx, (B, C, H, W), jnp.float32)
    params = init_flow_level_params(kp, C, width, depth)

    flow_fwd = jax.jit(flow_level_forward)

    x1, z2, logdet = jax.block_until_ready(flow_fwd(params, x))
    x1_r, z2_r, ld_r = _ref_flow_level(params, x)

    assert x1.shape == (B, 2 * C, H // 2, W // 2)
    assert z2.shape == (B, 2 * C, H // 2, W // 2)
    assert logdet.shape == (B,)
    assert jnp.allclose(x1, x1_r, atol=1e-3, rtol=1e-3)
    assert jnp.allclose(z2, z2_r, atol=1e-3, rtol=1e-3)
    assert jnp.allclose(logdet, ld_r, atol=1e-2, rtol=1e-3)

    # Second check with perturbed (non-zero) heads so the coupling /
    # Gaussianize Pallas kernels are exercised on non-trivial values.
    leaves, treedef = jax.tree_util.tree_flatten(params)
    pkeys = jax.random.split(jax.random.PRNGKey(1), len(leaves))
    params2 = jax.tree_util.tree_unflatten(
        treedef,
        [l + 0.05 * jax.random.normal(k, l.shape, l.dtype)
         for l, k in zip(leaves, pkeys)])

    x1b, z2b, ldb = jax.block_until_ready(flow_fwd(params2, x))
    x1_rb, z2_rb, ld_rb = _ref_flow_level(params2, x)
    assert jnp.allclose(x1b, x1_rb, atol=1e-3, rtol=1e-3)
    assert jnp.allclose(z2b, z2_rb, atol=1e-3, rtol=1e-3)
    assert jnp.allclose(ldb, ld_rb, atol=1e-2, rtol=1e-3)

    print("KERNEL_OK")
</pallas_src>

<mosaic_0001>
module attributes {stable_mosaic.version = 11 : i64} {
  func.func @_an_matmul_kernel(%arg0: i32, %arg1: memref<8x128xf32, #tpu.memory_space<vmem>>, %arg2: memref<128x128xf32, #tpu.memory_space<vmem>>, %arg3: memref<1x128xf32, #tpu.memory_space<vmem>>, %arg4: memref<8x128xf32, #tpu.memory_space<vmem>>) attributes {dimension_semantics = [#tpu.dimension_semantics<parallel>], iteration_bounds = array<i64: 2>, scalar_prefetch = 0 : i64, scratch_operands = 0 : i64, tpu.core_type = #tpu.core_type<tc>, window_params = [{transform_indices = @transform_0, window_bounds = array<i64: 8, 128>}, {pipeline_mode = #tpu.pipeline_mode<synchronous>, transform_indices = @transform_1, window_bounds = array<i64: 128, 128>}, {pipeline_mode = #tpu.pipeline_mode<synchronous>, transform_indices = @transform_2, window_bounds = array<i64: 1, 128>}, {transform_indices = @transform_3, window_bounds = array<i64: 8, 128>}]} {
    %c0 = arith.constant 0 : index
    %c0_0 = arith.constant 0 : index
    %0 = vector.load %arg1[%c0, %c0_0] : memref<8x128xf32, #tpu.memory_space<vmem>>, vector<8x128xf32>
    %c0_1 = arith.constant 0 : index
    %c0_2 = arith.constant 0 : index
    %1 = vector.load %arg2[%c0_1, %c0_2] : memref<128x128xf32, #tpu.memory_space<vmem>>, vector<128x128xf32>
    %cst = arith.constant dense<0.000000e+00> : vector<8x128xf32>
    %2 = tpu.matmul %0, %1, %cst {dimension_numbers = #tpu.dot_dimension_numbers<[1], [0], [0], [1], [0, 0, 1, 1], [], []>} : vector<8x128xf32>, vector<128x128xf32>, vector<8x128xf32> -> vector<8x128xf32>
    %c0_3 = arith.constant 0 : index
    %c0_4 = arith.constant 0 : index
    %3 = vector.load %arg3[%c0_3, %c0_4] : memref<1x128xf32, #tpu.memory_space<vmem>>, vector<1x128xf32>
    %4 = vector.broadcast %3 : vector<1x128xf32> to vector<8x128xf32>
    %5 = arith.addf %2, %4 : vector<8x128xf32>
    %c0_5 = arith.constant 0 : index
    %c0_6 = arith.constant 0 : index
    %6 = vector.load %arg4[%c0_5, %c0_6] : memref<8x128xf32, #tpu.memory_space<vmem>>, vector<8x128xf32>
    tpu.vector_store %arg4[%c0_5, %c0_6], %5 {strides = array<i32>} : memref<8x128xf32, #tpu.memory_space<vmem>>, vector<8x128xf32>,
    return
  }
  func.func @transform_0(%arg0: i32) -> (i32, i32) {
    %c0_i32 = arith.constant 0 : i32
    %c0_i32_0 = arith.constant 0 : i32
    return %arg0, %c0_i32 : i32, i32
  }
  func.func @transform_1(%arg0: i32) -> (i32, i32) {
    %c0_i32 = arith.constant 0 : i32
    %c0_i32_0 = arith.constant 0 : i32
    %c0_i32_1 = arith.constant 0 : i32
    return %c0_i32, %c0_i32_0 : i32, i32
  }
  func.func @transform_2(%arg0: i32) -> (i32, i32) {
    %c0_i32 = arith.constant 0 : i32
    %c0_i32_0 = arith.constant 0 : i32
    %c0_i32_1 = arith.constant 0 : i32
    return %c0_i32, %c0_i32_0 : i32, i32
  }
  func.func @transform_3(%arg0: i32) -> (i32, i32) {
    %c0_i32 = arith.constant 0 : i32
    %c0_i32_0 = arith.constant 0 : i32
    return %arg0, %c0_i32 : i32, i32
  }
}

module attributes {stable_mosaic.version = 11 : i64} {
  func.func @_coupling_kernel(%arg0: i32, %arg1: memref<8x128xf32, #tpu.memory_space<vmem>>, %arg2: memref<8x128xf32, #tpu.memory_space<vmem>>, %arg3: memref<8x128xf32, #tpu.memory_space<vmem>>, %arg4: memref<8x128xf32, #tpu.memory_space<vmem>>, %arg5: memref<8x1xf32, #tpu.memory_space<vmem>>) attributes {dimension_semantics = [#tpu.dimension_semantics<parallel>], iteration_bounds = array<i64: 1>, scalar_prefetch = 0 : i64, scratch_operands = 0 : i64, tpu.core_type = #tpu.core_type<tc>, window_params = [{transform_indices = @transform_0, window_bounds = array<i64: 8, 128>}, {transform_indices = @transform_1, window_bounds = array<i64: 8, 128>}, {transform_indices = @transform_2, window_bounds = array<i64: 8, 128>}, {transform_indices = @transform_3, window_bounds = array<i64: 8, 128>}, {transform_indices = @transform_4, window_bounds = array<i64: 8, 1>}]} {
    %c0 = arith.constant 0 : index
    %c0_0 = arith.constant 0 : index
    %0 = vector.load %arg3[%c0, %c0_0] : memref<8x128xf32, #tpu.memory_space<vmem>>, vector<8x128xf32>
    %cst = arith.constant 2.000000e+00 : f32
    %1 = vector.broadcast %cst : f32 to vector<8x128xf32>
    %2 = arith.addf %0, %1 : vector<8x128xf32>
    %cst_1 = arith.constant 0.000000e+00 : f32
    %3 = vector.broadcast %cst_1 : f32 to vector<8x128xf32>
    %4 = arith.subf %3, %2 : vector<8x128xf32>
    %cst_2 = arith.constant 0.000000e+00 : f32
    %5 = vector.broadcast %cst_2 : f32 to vector<8x128xf32>
    %6 = arith.maximumf %4, %5 : vector<8x128xf32>
    %7 = math.absf %2 : vector<8x128xf32>
    %cst_3 = arith.constant 0.000000e+00 : f32
    %8 = vector.broadcast %cst_3 : f32 to vector<8x128xf32>
    %9 = arith.subf %8, %7 : vector<8x128xf32>
    %10 = math.exp %9 : vector<8x128xf32>
    %cst_4 = arith.constant 1.000000e+00 : f32
    %11 = vector.broadcast %cst_4 : f32 to vector<8x128xf32>
    %12 = arith.addf %11, %10 : vector<8x128xf32>
    %13 = math.log %12 : vector<8x128xf32>
    %14 = arith.addf %6, %13 : vector<8x128xf32>
    %cst_5 = arith.constant 0.000000e+00 : f32
    %15 = vector.broadcast %cst_5 : f32 to vector<8x128xf32>
    %16 = arith.subf %15, %14 : vector<8x128xf32>
    %17 = math.exp %16 : vector<8x128xf32>
    %c0_6 = arith.constant 0 : index
    %c0_7 = arith.constant 0 : index
    %18 = vector.load %arg1[%c0_6, %c0_7] : memref<8x128xf32, #tpu.memory_space<vmem>>, vector<8x128xf32>
    %19 = arith.mulf %17, %18 : vector<8x128xf32>
    %c0_8 = arith.constant 0 : index
    %c0_9 = arith.constant 0 : index
    %20 = vector.load %arg2[%c0_8, %c0_9] : memref<8x128xf32, #tpu.memory_space<vmem>>, vector<8x128xf32>
    %21 = arith.addf %19, %20 : vector<8x128xf32>
    %c0_10 = arith.constant 0 : index
    %c0_11 = arith.constant 0 : index
    %22 = vector.load %arg4[%c0_10, %c0_11] : memref<8x128xf32, #tpu.memory_space<vmem>>, vector<8x128xf32>
    tpu.vector_store %arg4[%c0_10, %c0_11], %21 {strides = array<i32>} : memref<8x128xf32, #tpu.memory_space<vmem>>, vector<8x128xf32>,
    %cst_12 = arith.constant dense<0.000000e+00> : vector<8xf32>
    %23 = vector.multi_reduction <add>, %16, %cst_12 [1] : vector<8x128xf32> to vector<8xf32>
    %24 = vector.shape_cast %23 : vector<8xf32> to vector<8x1xf32>
    %c0_13 = arith.constant 0 : index
    %c0_14 = arith.constant 0 : index
    %25 = vector.load %arg5[%c0_13, %c0_14] : memref<8x1xf32, #tpu.memory_space<vmem>>, vector<8x1xf32>
    tpu.vector_store %arg5[%c0_13, %c0_14], %24 {strides = array<i32>} : memref<8x1xf32, #tpu.memory_space<vmem>>, vector<8x1xf32>,
    return
  }
  func.func @transform_0(%arg0: i32) -> (i32, i32) {
    %c0_i32 = arith.constant 0 : i32
    %c0_i32_0 = arith.constant 0 : i32
    return %arg0, %c0_i32 : i32, i32
  }
  func.func @transform_1(%arg0: i32) -> (i32, i32) {
    %c0_i32 = arith.constant 0 : i32
    %c0_i32_0 = arith.constant 0 : i32
    return %arg0, %c0_i32 : i32, i32
  }
  func.func @transform_2(%arg0: i32) -> (i32, i32) {
    %c0_i32 = arith.constant 0 : i32
    %c0_i32_0 = arith.constant 0 : i32
    return %arg0, %c0_i32 : i32, i32
  }
  func.func @transform_3(%arg0: i32) -> (i32, i32) {
    %c0_i32 = arith.constant 0 : i32
    %c0_i32_0 = arith.constant 0 : i32
    return %arg0, %c0_i32 : i32, i32
  }
  func.func @transform_4(%arg0: i32) -> (i32, i32) {
    %c0_i32 = arith.constant 0 : i32
    %c0_i32_0 = arith.constant 0 : i32
    return %arg0, %c0_i32 : i32, i32
  }
}

module attributes {stable_mosaic.version = 11 : i64} {
  func.func @_gaussianize_kernel(%arg0: i32, %arg1: memref<8x128xf32, #tpu.memory_space<vmem>>, %arg2: memref<8x128xf32, #tpu.memory_space<vmem>>, %arg3: memref<8x128xf32, #tpu.memory_space<vmem>>, %arg4: memref<8x128xf32, #tpu.memory_space<vmem>>, %arg5: memref<8x1xf32, #tpu.memory_space<vmem>>) attributes {dimension_semantics = [#tpu.dimension_semantics<parallel>], iteration_bounds = array<i64: 1>, scalar_prefetch = 0 : i64, scratch_operands = 0 : i64, tpu.core_type = #tpu.core_type<tc>, window_params = [{transform_indices = @transform_0, window_bounds = array<i64: 8, 128>}, {transform_indices = @transform_1, window_bounds = array<i64: 8, 128>}, {transform_indices = @transform_2, window_bounds = array<i64: 8, 128>}, {transform_indices = @transform_3, window_bounds = array<i64: 8, 128>}, {transform_indices = @transform_4, window_bounds = array<i64: 8, 1>}]} {
    %c0 = arith.constant 0 : index
    %c0_0 = arith.constant 0 : index
    %0 = vector.load %arg3[%c0, %c0_0] : memref<8x128xf32, #tpu.memory_space<vmem>>, vector<8x128xf32>
    %c0_1 = arith.constant 0 : index
    %c0_2 = arith.constant 0 : index
    %1 = vector.load %arg1[%c0_1, %c0_2] : memref<8x128xf32, #tpu.memory_space<vmem>>, vector<8x128xf32>
    %c0_3 = arith.constant 0 : index
    %c0_4 = arith.constant 0 : index
    %2 = vector.load %arg2[%c0_3, %c0_4] : memref<8x128xf32, #tpu.memory_space<vmem>>, vector<8x128xf32>
    %3 = arith.subf %1, %2 : vector<8x128xf32>
    %cst = arith.constant 0.000000e+00 : f32
    %4 = vector.broadcast %cst : f32 to vector<8x128xf32>
    %5 = arith.subf %4, %0 : vector<8x128xf32>
    %6 = math.exp %5 : vector<8x128xf32>
    %7 = arith.mulf %3, %6 : vector<8x128xf32>
    %c0_5 = arith.constant 0 : index
    %c0_6 = arith.constant 0 : index
    %8 = vector.load %arg4[%c0_5, %c0_6] : memref<8x128xf32, #tpu.memory_space<vmem>>, vector<8x128xf32>
    tpu.vector_store %arg4[%c0_5, %c0_6], %7 {strides = array<i32>} : memref<8x128xf32, #tpu.memory_space<vmem>>, vector<8x128xf32>,
    %cst_7 = arith.constant dense<0.000000e+00> : vector<8xf32>
    %9 = vector.multi_reduction <add>, %0, %cst_7 [1] : vector<8x128xf32> to vector<8xf32>
    %10 = vector.shape_cast %9 : vector<8xf32> to vector<8x1xf32>
    %cst_8 = arith.constant 0.000000e+00 : f32
    %11 = vector.broadcast %cst_8 : f32 to vector<8x1xf32>
    %12 = arith.subf %11, %10 : vector<8x1xf32>
    %c0_9 = arith.constant 0 : index
    %c0_10 = arith.constant 0 : index
    %13 = vector.load %arg5[%c0_9, %c0_10] : memref<8x1xf32, #tpu.memory_space<vmem>>, vector<8x1xf32>
    tpu.vector_store %arg5[%c0_9, %c0_10], %12 {strides = array<i32>} : memref<8x1xf32, #tpu.memory_space<vmem>>, vector<8x1xf32>,
    return
  }
  func.func @transform_0(%arg0: i32) -> (i32, i32) {
    %c0_i32 = arith.constant 0 : i32
    %c0_i32_0 = arith.constant 0 : i32
    return %arg0, %c0_i32 : i32, i32
  }
  func.func @transform_1(%arg0: i32) -> (i32, i32) {
    %c0_i32 = arith.constant 0 : i32
    %c0_i32_0 = arith.constant 0 : i32
    return %arg0, %c0_i32 : i32, i32
  }
  func.func @transform_2(%arg0: i32) -> (i32, i32) {
    %c0_i32 = arith.constant 0 : i32
    %c0_i32_0 = arith.constant 0 : i32
    return %arg0, %c0_i32 : i32, i32
  }
  func.func @transform_3(%arg0: i32) -> (i32, i32) {
    %c0_i32 = arith.constant 0 : i32
    %c0_i32_0 = arith.constant 0 : i32
    return %arg0, %c0_i32 : i32, i32
  }
  func.func @transform_4(%arg0: i32) -> (i32, i32) {
    %c0_i32 = arith.constant 0 : i32
    %c0_i32_0 = arith.constant 0 : i32
    return %arg0, %c0_i32 : i32, i32
  }
}

</mosaic_0001>

<llo_original>
// kernel: neg.0
$region0: #{neg.0}
  #allocation0 [shape = 's32[1]{0}', space=sflag, size = 0x4, scoped, tag = 'scoped memory for neg.0']
  %s0 = inlined_call_operand.vmem [shape: f32[16], index: 0, kind: input, shape index: {}]
  %s1 = inlined_call_operand.vmem [shape: f32[16], index: 1, kind: output, shape index: {}]
  %v2 = vld [vmem:[%s0] sm:$0x1]
  %3 = xla_tuple %v2
  %4 = xla_tuple %3
  %v5 = vxor.u32 %v2, 2147483648
  %6 = xla_tuple %v5
  %7 = vst [vmem:[%s1] sm:$0x1] %v5

// kernel: flow_level_forward.5
$region0: #{flow_level_forward.5}
  #allocation0 [shape = 'u32[]', space=smem, size = 0x4, offset = 0x4, fixed_abs, tag = 'smem constant byte address 0x4 - core index']
  #allocation1 [shape = 'u32[144,128]{1,0:T(1,128)}', space=vmem, size = 0x12000, scoped, tag = 'internal scratch']
  %s0 = inlined_call_operand.vmem [shape: f32[16,128], index: 0, kind: input, shape index: {}]
  %s1 = inlined_call_operand.vmem [shape: f32[128,128], index: 1, kind: input, shape index: {}]
  %s2 = inlined_call_operand.vmem [shape: f32[1,128], index: 2, kind: input, shape index: {}]
  %s3 = inlined_call_operand.vmem [shape: f32[16,128], index: 3, kind: output, shape index: {}]
  %s4 = sld [smem:[#allocation0]]
  $region45: #{flow_level_forward.5} parent=0
    _
  %s6 = ssub.s32 1, %s4
  %s7 = scalar_select 0, %s6, %s4
  loop: start=0, step=1, limit=4
  $region2: #{flow_level_forward.5} parent=0 // loop_pre_header
    _
  $region3: #{flow_level_forward.5} parent=0 // loop_header
    %s9 = sphi 0, %s13
    %p10 = scmp.ge.s32.totalorder %s9, 4
    %s19 = sphi 0, %s21
    %s22 = sphi 0, %s19
    %s23 = sphi 0, %s22
    %s39 = sphi 0, %s23
    %s43 = sphi 0, %s43
    %s45 = sphi 0, %s43
    %s46 = sphi 0, %s45
    %s60 = sphi 0, %s46
    %s64 = sphi 0, %s64
    %s66 = sphi 0, %s64
    %s67 = sphi 0, %s66
    %s81 = sphi 0, %s67
    %s87 = sphi 0, %s89
    %s90 = sphi 0, %s87
    %s91 = sphi 0, %s90
    %s107 = sphi 0, %s91
  $region4: #{flow_level_forward.5} parent=0 // loop_header_branch
    %12 = sbr.rel (%p10) target = $region8
  $region5: #{flow_level_forward.5} parent=0 // loop_body
    %s14 = ssub.s32 %s9, 1
    %s15 = ssub.s32 %s9, 2
    %s16 = sadd.s32 %s9, 1
    %s17 = ssub.s32 %s9, %s16
    %p18 = scmp.eq.s32.totalorder %s17, 0
    %s20 = sadd.s32 %s19, 1
    %s21 = scalar_select %p18, %s19, %s20
    %p24 = pneg %p18
    %p25 = scmp.eq.s32.totalorder %s9, 1
    %p26 = por %p24, %p25
    %p27 = scmp.ne.s32.totalorder %s19, %s22
    %p28 = scmp.eq.s32.totalorder %s9, 0
    %p29 = por %p27, %p28
    %p30 = scmp.ne.s32.totalorder %s19, %s22
    %p31 = scmp.eq.s32.totalorder %s14, 1
    %p32 = por %p30, %p31
    %p33 = scmp.ne.s32.totalorder %s22, %s23
    %p34 = scmp.eq.s32.totalorder %s14, 0
    %p35 = por %p33, %p34
    %p36 = scmp.ne.s32.totalorder %s22, %s23
    %p37 = scmp.eq.s32.totalorder %s15, 1
    %p38 = por %p36, %p37
    %p40 = scmp.ne.s32.totalorder %s23, %s39
    %p41 = scmp.eq.s32.totalorder %s15, 0
    %p42 = por %p40, %p41
    %s44 = sadd.s32 %s43, 1
    %p47 = scmp.eq.s32.totalorder %s9, 1
    %p48 = scmp.ne.s32.totalorder %s43, %s45
    %p49 = scmp.eq.s32.totalorder %s9, 0
    %p50 = por %p48, %p49
    %p51 = scmp.ne.s32.totalorder %s43, %s45
    %p52 = scmp.eq.s32.totalorder %s14, 1
    %p53 = por %p51, %p52
    %p54 = scmp.ne.s32.totalorder %s45, %s46
    %p55 = scmp.eq.s32.totalorder %s14, 0
    %p56 = por %p54, %p55
    %p57 = scmp.ne.s32.totalorder %s45, %s46
    %p58 = scmp.eq.s32.totalorder %s15, 1
    %p59 = por %p57, %p58
    %p61 = scmp.ne.s32.totalorder %s46, %s60
    %p62 = scmp.eq.s32.totalorder %s15, 0
    %p63 = por %p61, %p62
    %s65 = sadd.s32 %s64, 1
    %p68 = scmp.eq.s32.totalorder %s9, 1
    %p69 = scmp.ne.s32.totalorder %s64, %s66
    %p70 = scmp.eq.s32.totalorder %s9, 0
    %p71 = por %p69, %p70
    %p72 = scmp.ne.s32.totalorder %s64, %s66
    %p73 = scmp.eq.s32.totalorder %s14, 1
    %p74 = por %p72, %p73
    %p75 = scmp.ne.s32.totalorder %s66, %s67
    %p76 = scmp.eq.s32.totalorder %s14, 0
    %p77 = por %p75, %p76
    %p78 = scmp.ne.s32.totalorder %s66, %s67
    %p79 = scmp.eq.s32.totalorder %s15, 1
    %p80 = por %p78, %p79
    %p82 = scmp.ne.s32.totalorder %s67, %s81
    %p83 = scmp.eq.s32.totalorder %s15, 0
    %p84 = por %p82, %p83
    %s85 = ssub.s32 %s9, %s16
    %p86 = scmp.eq.s32.totalorder %s85, 0
    %s88 = sadd.s32 %s87, 1
    %s89 = scalar_select %p86, %s87, %s88
    %p92 = pneg %p86
    %p93 = scmp.eq.s32.totalorder %s9, 1
    %p94 = por %p92, %p93
    %p95 = scmp.ne.s32.totalorder %s87, %s90
    %p96 = scmp.eq.s32.totalorder %s9, 0
    %p97 = por %p95, %p96
    %p98 = scmp.ne.s32.totalorder %s87, %s90
    %p99 = scmp.eq.s32.totalorder %s14, 1
    %p100 = por %p98, %p99
    %p101 = scmp.ne.s32.totalorder %s90, %s91
    %p102 = scmp.eq.s32.totalorder %s14, 0
    %p103 = por %p101, %p102
    %p104 = scmp.ne.s32.totalorder %s90, %s91
    %p105 = scmp.eq.s32.totalorder %s15, 1
    %p106 = por %p104, %p105
    %p108 = scmp.ne.s32.totalorder %s91, %s107
    %p109 = scmp.eq.s32.totalorder %s15, 0
    %p110 = por %p108, %p109
    %p111 = scmp.le.s32.totalorder 1, %s9
    %p112 = scmp.lt.s32.totalorder %s9, 3
    %p113 = pnand %p111, %p112
    %p114 = pneg %p113
    // Predicated region
    $region9: #{flow_level_forward.5} parent=5 // pred_check
      _
    $region10: #{flow_level_forward.5} parent=5 // pred_check_branch
      %116 = sbr.rel (%p113) target = $region12
    $region11: #{flow_level_forward.5} parent=5 // pred_region
      %s117 = ssub.s32 %s9, 1
      // Predicated region
      $region13: #{flow_level_forward.5} parent=11 // pred_check
        %p118 = pneg %p56
      $region14: #{flow_level_forward.5} parent=11 // pred_check_branch
        %120 = sbr.rel (%p118) target = $region16
      $region15: #{flow_level_forward.5} parent=11 // pred_region
        _
      $region16: #{flow_level_forward.5} parent=11 // pred_fallthru
        _
      // Predicated region
      $region17: #{flow_level_forward.5} parent=11 // pred_check
        %p121 = pneg %p77
      $region18: #{flow_level_forward.5} parent=11 // pred_check_branch
        %123 = sbr.rel (%p121) target = $region20
      $region19: #{flow_level_forward.5} parent=11 // pred_region
        _
      $region20: #{flow_level_forward.5} parent=11 // pred_fallthru
        _
    $region12: #{flow_level_forward.5} parent=5 // pred_fallthru
      _
    %p124 = scmp.lt.s32.totalorder %s9, 2
    // Predicated region
    $region21: #{flow_level_forward.5} parent=5 // pred_check
      %p125 = pneg %p124
    $region22: #{flow_level_forward.5} parent=5 // pred_check_branch
      %127 = sbr.rel (%p125) target = $region24
    $region23: #{flow_level_forward.5} parent=5 // pred_region
      // Predicated region
      $region25: #{flow_level_forward.5} parent=23 // pred_check
        %p128 = pneg %p29
      $region26: #{flow_level_forward.5} parent=23 // pred_check_branch
        %130 = sbr.rel (%p128) target = $region28
      $region27: #{flow_level_forward.5} parent=23 // pred_region
        %p131 = scmp.lt.s32.totalorder %s9, 1
        %s132 = scalar_select %p131, %s9, 1
        %s133 = smul.addr %s132, 8
        %s134 = scalar_lea.vmem %s0, %s133
      $region28: #{flow_level_forward.5} parent=23 // pred_fallthru
        _
    $region24: #{flow_level_forward.5} parent=5 // pred_fallthru
      _
    %p135 = scmp.le.s32.totalorder 1, %s9
    %p136 = scmp.lt.s32.totalorder %s9, 3
    %p137 = pnand %p135, %p136
    %p138 = pneg %p137
    // Predicated region
    $region29: #{flow_level_forward.5} parent=5 // pred_check
      _
    $region30: #{flow_level_forward.5} parent=5 // pred_check_branch
      %140 = sbr.rel (%p137) target = $region32
    $region31: #{flow_level_forward.5} parent=5 // pred_region
      %s141 = ssub.s32 %s9, 1
      %p142 = scmp.lt.s32.totalorder %s14, 1
      %s143 = scalar_select %p142, %s14, 1
      %s144 = smul.addr %s143, 8
      %s145 = scalar_lea.vmem %s0, %s144
      %p146 = pneg %p35
      %p147 = pneg %p32
      %p148 = pneg %p56
      %p149 = pneg %p53
      %p150 = pneg %p77
      %p151 = pneg %p74
      %p152 = pneg %p103
      %p153 = pneg %p100
      %p154 = scmp.lt.s32.totalorder %s14, 1
      %s155 = scalar_select %p154, %s14, 1
      %s156 = smul.addr %s155, 8
      %s157 = scalar_lea.vmem %s3, %s156
      %p158 = scmp.lt.s32.totalorder %s14, 1
      %s159 = scalar_select %p158, %s14, 1
      %s160 = smul.addr %s159, 8
      %s161 = scalar_lea.vmem %s0, %s160
      %p162 = scmp.lt.s32.totalorder %s14, 1
      %s163 = scalar_select %p162, %s14, 1
      %s164 = smul.addr %s163, 8
      %s165 = scalar_lea.vmem %s3, %s164
      %v166 = vld [vmem:[%s161] sm:$0xff]
      %v167 = vld [vmem:[%s1] sm:$0xff]
      %v168 = vld [vmem:[%s1 + $0x8] sm:$0xff]
      %v169 = vld [vmem:[%s1 + $0x10] sm:$0xff]
      %v170 = vld [vmem:[%s1 + $0x18] sm:$0xff]
      %v171 = vld [vmem:[%s1 + $0x20] sm:$0xff]
      %v172 = vld [vmem:[%s1 + $0x28] sm:$0xff]
      %v173 = vld [vmem:[%s1 + $0x30] sm:$0xff]
      %v174 = vld [vmem:[%s1 + $0x38] sm:$0xff]
      %v175 = vld [vmem:[%s1 + $0x40] sm:$0xff]
      %v176 = vld [vmem:[%s1 + $0x48] sm:$0xff]
      %v177 = vld [vmem:[%s1 + $0x50] sm:$0xff]
      %v178 = vld [vmem:[%s1 + $0x58] sm:$0xff]
      %v179 = vld [vmem:[%s1 + $0x60] sm:$0xff]
      %v180 = vld [vmem:[%s1 + $0x68] sm:$0xff]
      %v181 = vld [vmem:[%s1 + $0x70] sm:$0xff]
      %v182 = vld [vmem:[%s1 + $0x78] sm:$0xff]
      %v183 = vld [vmem:[%s2] sm:$0x1]
      %v185 = vlaneseq
      %v186 = vshrl.u32 %v185, 7
      %v187 = vsub.s32 0, %v186
      %v188 = vrot.slane %v183, %v187
      %190 = vmatprep.subr.mxu0 0.0
      %191 = vmatpush1.msra.mxu0 %v182
      %192 = vmatprep.subr.mxu0 0.0
      %193 = vmatpush1.msra.mxu0 %v181
      %194 = vmatprep.subr.mxu0 0.0
      %195 = vmatpush1.msra.mxu0 %v180
      %196 = vmatprep.subr.mxu0 0.0
      %197 = vmatpush1.msra.mxu0 %v179
      %198 = vmatprep.subr.mxu0 0.0
      %199 = vmatpush1.msra.mxu0 %v178
      %200 = vmatprep.subr.mxu0 0.0
      %201 = vmatpush1.msra.mxu0 %v177
      %202 = vmatprep.subr.mxu0 0.0
      %203 = vmatpush1.msra.mxu0 %v176
      %204 = vmatprep.subr.mxu0 0.0
      %205 = vmatpush1.msra.mxu0 %v175
      %206 = vmatprep.subr.mxu0 0.0
      %207 = vmatpush1.msra.mxu0 %v174
      %208 = vmatprep.subr.mxu0 0.0
      %209 = vmatpush1.msra.mxu0 %v173
      %210 = vmatprep.subr.mxu0 0.0
      %211 = vmatpush1.msra.mxu0 %v172
      %212 = vmatprep.subr.mxu0 0.0
      %213 = vmatpush1.msra.mxu0 %v171
      %214 = vmatprep.subr.mxu0 0.0
      %215 = vmatpush1.msra.mxu0 %v170
      %216 = vmatprep.subr.mxu0 0.0
      %217 = vmatpush1.msra.mxu0 %v169
      %218 = vmatprep.subr.mxu0 0.0
      %219 = vmatpush1.msra.mxu0 %v168
      %220 = vmatprep.subr.mxu0 0.0
      %221 = vmatpush1.msra.mxu0 %v167
      %222 = vmatprep.subr.mxu0 0.0
      %223 = vmatpush2.msra.mxu0 0.0
      %224 = vmatprep.subr.mxu0 0.0
      %225 = vmatpush2.msra.mxu0 0.0
      %226 = vmatprep.subr.mxu0 0.0
      %227 = vmatpush2.msra.mxu0 0.0
      %228 = vmatprep.subr.mxu0 0.0
      %229 = vmatpush2.msra.mxu0 0.0
      %230 = vmatprep.subr.mxu0 0.0
      %231 = vmatpush2.msra.mxu0 0.0
      %232 = vmatprep.subr.mxu0 0.0
      %233 = vmatpush2.msra.mxu0 0.0
      %234 = vmatprep.subr.mxu0 0.0
      %235 = vmatpush2.msra.mxu0 0.0
      %236 = vmatprep.subr.mxu0 0.0
      %237 = vmatpush2.msra.mxu0 0.0
      %238 = vmatprep.subr.mxu0 0.0
      %239 = vmatpush2.msra.mxu0 0.0
      %240 = vmatprep.subr.mxu0 0.0
      %241 = vmatpush2.msra.mxu0 0.0
      %242 = vmatprep.subr.mxu0 0.0
      %243 = vmatpush2.msra.mxu0 0.0
      %244 = vmatprep.subr.mxu0 0.0
      %245 = vmatpush2.msra.mxu0 0.0
      %246 = vmatprep.subr.mxu0 0.0
      %247 = vmatpush2.msra.mxu0 0.0
      %248 = vmatprep.subr.mxu0 0.0
      %249 = vmatpush2.msra.mxu0 0.0
      %250 = vmatprep.subr.mxu0 0.0
      %251 = vmatpush2.msra.mxu0 0.0
      %252 = vmatprep.subr.mxu0 0.0
      %253 = vmatpush2.msra.mxu0 0.0
      %254 = vmatprep.mubr.f32.mxu0 0.0
      %255 = vmatmul.mubr.f32.gmra.mxu0 %v166
      %v256 = vpop.f32.mrf.mxu0
      %v257 = vadd.f32 %v188, %v256
      %v258 = vpop.f32.mrf.mxu0
      %259 = vdwg.mxu0
      %260 = vst [vmem:[%s165] sm:$0xff] %v257
      %p261 = scmp.lt.s32.totalorder %s14, 1
      %s262 = scalar_select %p261, %s14, 1
      %s263 = smul.addr %s262, 8
      %s264 = scalar_lea.vmem %s3, %s263
      // Predicated region
      $region33: #{flow_level_forward.5} parent=31 // pred_check
        %p265 = pneg %p100
      $region34: #{flow_level_forward.5} parent=31 // pred_check_branch
        %267 = sbr.rel (%p265) target = $region36
      $region35: #{flow_level_forward.5} parent=31 // pred_region
        _
      $region36: #{flow_level_forward.5} parent=31 // pred_fallthru
        _
    $region32: #{flow_level_forward.5} parent=5 // pred_fallthru
      _
    %p268 = scmp.le.s32.totalorder 2, %s9
    // Predicated region
    $region37: #{flow_level_forward.5} parent=5 // pred_check
      %p269 = pneg %p268
    $region38: #{flow_level_forward.5} parent=5 // pred_check_branch
      %271 = sbr.rel (%p269) target = $region40
    $region39: #{flow_level_forward.5} parent=5 // pred_region
      %s272 = ssub.s32 %s9, 2
      // Predicated region
      $region41: #{flow_level_forward.5} parent=39 // pred_check
        %p273 = pneg %p106
      $region42: #{flow_level_forward.5} parent=39 // pred_check_branch
        %275 = sbr.rel (%p273) target = $region44
      $region43: #{flow_level_forward.5} parent=39 // pred_region
        %p276 = scmp.lt.s32.totalorder %s15, 1
        %s277 = scalar_select %p276, %s15, 1
        %s278 = smul.addr %s277, 8
        %s279 = scalar_lea.vmem %s3, %s278
      $region44: #{flow_level_forward.5} parent=39 // pred_fallthru
        _
    $region40: #{flow_level_forward.5} parent=5 // pred_fallthru
      _
  $region6: #{flow_level_forward.5} parent=0 // loop_footer
    %s13 = sadd.s32 1, %s9
  $region7: #{flow_level_forward.5} parent=0 // loop_footer_branch
    %8 = sbr.rel target = $region3
  $region8: #{flow_level_forward.5} parent=0 // loop_exit
    _

// kernel: mul.34
$region0: #{mul.34}
  #allocation0 [shape = 's32[1]{0}', space=sflag, size = 0x4, scoped, tag = 'scoped memory for mul.34']
  %s0 = inlined_call_operand.vmem [shape: f32[16], index: 0, kind: input, shape index: {}]
  %s1 = inlined_call_operand.vmem [shape: f32[16], index: 1, kind: input, shape index: {}]
  %s2 = inlined_call_operand.vmem [shape: f32[16], index: 2, kind: output, shape index: {}]
  %v3 = vld [vmem:[%s0] sm:$0x1]
  %v4 = vld [vmem:[%s1] sm:$0x1]
  %5 = xla_tuple %v3, %v4
  %6 = xla_tuple %5
  %v7 = vmul.f32 %v3, %v4
  %8 = xla_tuple %v7
  %9 = vst [vmem:[%s2] sm:$0x1] %v7

// kernel: flow_level_forward.6
$region0: #{flow_level_forward.6}
  #allocation0 [shape = 'u32[]', space=smem, size = 0x4, offset = 0x4, fixed_abs, tag = 'smem constant byte address 0x4 - core index']
  #allocation1 [shape = 'u32[144,128]{1,0:T(1,128)}', space=vmem, size = 0x12000, scoped, tag = 'internal scratch']
  %s0 = inlined_call_operand.vmem [shape: f32[8,128], index: 0, kind: input, shape index: {}]
  %s1 = inlined_call_operand.vmem [shape: f32[8,128], index: 1, kind: input, shape index: {}]
  %s2 = inlined_call_operand.vmem [shape: f32[8,128], index: 2, kind: input, shape index: {}]
  %s3 = inlined_call_operand.vmem [shape: f32[8,128], index: 3, kind: output, shape index: {0}]
  %s4 = inlined_call_operand.vmem [shape: f32[8,1], index: 4, kind: output, shape index: {1}]
  %5 = xla_tuple %s3, %s4
  %s6 = sld [smem:[#allocation0]]
  $region30: #{flow_level_forward.6} parent=0
    _
  %s8 = ssub.s32 1, %s6
  %s9 = scalar_select 0, %s8, %s6
  // Predicated region
  $region2: #{flow_level_forward.6} parent=0 // pred_check
    _
  $region3: #{flow_level_forward.6} parent=0 // pred_check_branch
    %11 = sbr.rel (0) target = $region5
  $region4: #{flow_level_forward.6} parent=0 // pred_region
    _
  $region5: #{flow_level_forward.6} parent=0 // pred_fallthru
    _
  // Predicated region
  $region6: #{flow_level_forward.6} parent=0 // pred_check
    _
  $region7: #{flow_level_forward.6} parent=0 // pred_check_branch
    %13 = sbr.rel (0) target = $region9
  $region8: #{flow_level_forward.6} parent=0 // pred_region
    _
  $region9: #{flow_level_forward.6} parent=0 // pred_fallthru
    _
  // Predicated region
  $region10: #{flow_level_forward.6} parent=0 // pred_check
    _
  $region11: #{flow_level_forward.6} parent=0 // pred_check_branch
    %15 = sbr.rel (0) target = $region13
  $region12: #{flow_level_forward.6} parent=0 // pred_region
    _
  $region13: #{flow_level_forward.6} parent=0 // pred_fallthru
    _
  %v16 = vld [vmem:[%s2] sm:$0xff]
  %v17 = vadd.f32 %v16, 2.0
  %v18 = vsub.f32 0.0, %v17
  %v19 = vmax.f32 %v18, 0.0
  %v20 = vand.u32 2147483647, %v17
  %v21 = vsub.f32 0.0, %v20
  %v22 = vmul.f32 %v21, 1.442695
  %v23 = vpow.pop %v22
  %v24 = vadd.f32 %v23, 1.0
  %v25 = vlog2.pop %v24
  %v26 = vmul.f32 %v25, 0.6931472
  %v27 = vadd.f32 %v19, %v26
  %v28 = vsub.f32 0.0, %v27
  %v29 = vmul.f32 %v28, 1.442695
  %v30 = vpow.pop %v29
  %v31 = vld [vmem:[%s0] sm:$0xff]
  %v32 = vmul.f32 %v30, %v31
  %v33 = vld [vmem:[%s1] sm:$0xff]
  %v34 = vadd.f32 %v32, %v33
  %35 = vst [vmem:[%s3] sm:$0xff] %v34
  %36 = vadd.xlane.f32.xlu0 %v28
  %v37 = vpop.xlane.xlu0 %36
  %vm38 = vcmask 7168
  %39 = vst.msk [vmem:[%s4] sm:$0xff] %vm38, %v37
  // Predicated region
  $region14: #{flow_level_forward.6} parent=0 // pred_check
    _
  $region15: #{flow_level_forward.6} parent=0 // pred_check_branch
    %41 = sbr.rel (0) target = $region17
  $region16: #{flow_level_forward.6} parent=0 // pred_region
    _
  $region17: #{flow_level_forward.6} parent=0 // pred_fallthru
    _
  // Predicated region
  $region18: #{flow_level_forward.6} parent=0 // pred_check
    _
  $region19: #{flow_level_forward.6} parent=0 // pred_check_branch
    %43 = sbr.rel (0) target = $region21
  $region20: #{flow_level_forward.6} parent=0 // pred_region
    _
  $region21: #{flow_level_forward.6} parent=0 // pred_fallthru
    _
  // Predicated region
  $region22: #{flow_level_forward.6} parent=0 // pred_check
    _
  $region23: #{flow_level_forward.6} parent=0 // pred_check_branch
    %45 = sbr.rel (0) target = $region25
  $region24: #{flow_level_forward.6} parent=0 // pred_region
    _
  $region25: #{flow_level_forward.6} parent=0 // pred_fallthru
    _
  // Predicated region
  $region26: #{flow_level_forward.6} parent=0 // pred_check
    _
  $region27: #{flow_level_forward.6} parent=0 // pred_check_branch
    %47 = sbr.rel (0) target = $region29
  $region28: #{flow_level_forward.6} parent=0 // pred_region
    _
  $region29: #{flow_level_forward.6} parent=0 // pred_fallthru
    _

// kernel: custom-call.9
$region0: #{custom-call.9}
  %s0 = inlined_call_operand.vmem [shape: f32[16,16], index: 0, kind: input, shape index: {}]
  %s1 = inlined_call_operand.vmem [shape: f32[16,16], index: 1, kind: output, shape index: {0}]
  %s2 = inlined_call_operand.hbm [shape: s32[16], index: 2, kind: output, shape index: {1}]
  %s3 = inlined_call_operand.hbm [shape: s32[16], index: 3, kind: output, shape index: {2}]
  %4 = xla_tuple %s1, %s2, %s3
  $region1: #{custom-call.9} parent=0
    #allocation0 [shape = 'u8[8192]{0}', space=vmem, size = 0x2000, scoped, tag = 'operand span for operand 0']
    #allocation1 [shape = 'u8[8192]{0}', space=vmem, size = 0x2000, scoped, tag = 'operand span for operand 1']
    #allocation2 [shape = 'u8[4096]{0}', space=vmem, size = 0x1000, scoped, tag = 'operand span for operand 2']
    #allocation3 [shape = 'u8[512]{0}', space=vmem, size = 0x400, scoped, tag = 'packed  for operand 2']
    #allocation4 [shape = 's32[1]{0}', space=sflag, size = 0x4, scoped, tag = 'scoped memory for custom-call.9']
    #allocation5 [shape = 'u8[4096]{0}', space=vmem, size = 0x1000, scoped, tag = 'operand span for operand 3']
    #allocation6 [shape = 'u8[512]{0}', space=vmem, size = 0x400, scoped, tag = 'packed  for operand 3']
    #allocation7 [shape = 's32[1]{0}', space=sflag, size = 0x4, scoped, tag = 'scoped memory for custom-call.9']
    #allocation8 [shape = 's32[16,128]{1,0}', space=vmem, size = 0x2000, scoped, tag = 'scratch for permutations']
    %5 = vsyncpa [#allocation4], 0
    %6 = vsyncpa [#allocation7], 0
    %p8 = scmp.gt.s32.totalorder 16, 0
    // Predicated region
    $region2: #{custom-call.9} parent=1 // pred_check
      %p9 = pneg %p8
    $region3: #{custom-call.9} parent=1 // pred_check_branch
      %11 = sbr.rel (%p9) target = $region5
    $region4: #{custom-call.9} parent=1 // pred_region
      %s12 = sshra.s32 16, 3
      %p13 = scmp.gt.s32.totalorder %s12, 0
      // Predicated region
      $region6: #{custom-call.9} parent=4 // pred_check
        %p14 = pneg %p13
      $region7: #{custom-call.9} parent=4 // pred_check_branch
        %16 = sbr.rel (%p14) target = $region9
      $region8: #{custom-call.9} parent=4 // pred_region
        %s17 = ssub.s32 %s12, 1
        %s18 = smul.u32 %s17, 128
        %s19 = sshra.s32 %s18, 4
        %s20 = scalar_lea.vmem %s0, %s19
        %v21 = vld [vmem:[%s0] sm:$0xff]
        // While loop
        $region10: #{custom-call.9} parent=8 // loop_pre_header
          _
        $region11: #{custom-call.9} parent=8 // loop_header
          %s22 = sphi %s0, %s44
          %s23 = sphi [#allocation0], %s45
          %v24 = vphi %v21, %v46
          %s25 = ssub.s32 %s20, 64
          %p26 = scmp.gt.s32.totalorder %s22, %s25
        $region12: #{custom-call.9} parent=8 // loop_header_branch
          %28 = sbr.rel (%p26) target = $region16
        $region13: #{custom-call.9} parent=8 // loop_body
          %29 = vst [vmem:[%s23] sm:$0xff] %v24
          %v30 = vld [vmem:[%s22 + $0x8] sm:$0xff]
          %31 = vst [vmem:[%s23 + $0x8] sm:$0xff] %v30
          %v32 = vld [vmem:[%s22 + $0x10] sm:$0xff]
          %33 = vst [vmem:[%s23 + $0x10] sm:$0xff] %v32
          %v34 = vld [vmem:[%s22 + $0x18] sm:$0xff]
          %35 = vst [vmem:[%s23 + $0x18] sm:$0xff] %v34
          %v36 = vld [vmem:[%s22 + $0x20] sm:$0xff]
          %37 = vst [vmem:[%s23 + $0x20] sm:$0xff] %v36
          %v38 = vld [vmem:[%s22 + $0x28] sm:$0xff]
          %39 = vst [vmem:[%s23 + $0x28] sm:$0xff] %v38
          %v40 = vld [vmem:[%s22 + $0x30] sm:$0xff]
          %41 = vst [vmem:[%s23 + $0x30] sm:$0xff] %v40
          %v42 = vld [vmem:[%s22 + $0x38] sm:$0xff]
          %43 = vst [vmem:[%s23 + $0x38] sm:$0xff] %v42
        $region14: #{custom-call.9} parent=8 // loop_footer
          %s44 = scalar_lea.vmem %s22, 64
          %s45 = scalar_lea.vmem %s23, 64
          %v46 = vld [vmem:[%s22 + $0x40] sm:$0xff]
        $region15: #{custom-call.9} parent=8 // loop_footer_branch
          %47 = sbr.rel target = $region11
        $region16: #{custom-call.9} parent=8 // loop_exit
          _
        // While loop
        $region17: #{custom-call.9} parent=8 // loop_pre_header
          _
        $region18: #{custom-call.9} parent=8 // loop_header
          %s48 = sphi %s22, %s56
          %s49 = sphi %s23, %s57
          %v50 = vphi %v24, %v50
          %p51 = scmp.gt.s32.totalorder %s48, %s20
        $region19: #{custom-call.9} parent=8 // loop_header_branch
          %53 = sbr.rel (%p51) target = $region23
        $region20: #{custom-call.9} parent=8 // loop_body
          %v54 = vld [vmem:[%s48] sm:$0xff]
          %55 = vst [vmem:[%s49] sm:$0xff] %v54
        $region21: #{custom-call.9} parent=8 // loop_footer
          %s56 = scalar_lea.vmem %s48, 8
          %s57 = scalar_lea.vmem %s49, 8
        $region22: #{custom-call.9} parent=8 // loop_footer_branch
          %58 = sbr.rel target = $region18
        $region23: #{custom-call.9} parent=8 // loop_exit
          _
      $region9: #{custom-call.9} parent=4 // pred_fallthru
        _
      %s59 = sand.u32 16, 7
      %s60 = sshll.u32 1, %s59
      %s61 = ssub.s32 %s60, 1
      %s62 = smul.u32 %s12, 128
      %s63 = sshra.s32 %s62, 4
      %s64 = scalar_lea.vmem [#allocation0], %s63
      %s65 = smul.u32 %s12, 128
      %s66 = sshra.s32 %s65, 4
      %s67 = scalar_lea.vmem %s0, %s66
      %v68 = vld [vmem:[%s67] sm:%s61]
      %69 = vst [vmem:[%s64] sm:%s61] %v68
    $region5: #{custom-call.9} parent=1 // pred_fallthru
      _
    %v70 = vld [vmem:[#allocation0] sm:$0xff]
    %71 = vst [vmem:[#allocation1] sm:$0xff] %v70
    %s72 = scalar_lea.vmem [#allocation1], 8
    %s73 = scalar_lea.vmem [#allocation0], 8
    %v74 = vld [vmem:[%s73] sm:$0xff]
    %75 = vst [vmem:[%s72] sm:$0xff] %v74
    %76 = vst [vmem:[#allocation2] sm:$0x1] 0
    %v77 = vlaneseq
    %v78 = vshrl.u32 %v77, 7
    %v79 = vmov %v78
    loop: start=0, step=1, limit=2
    $region24: #{custom-call.9} parent=1 // loop_pre_header
      _
    $region25: #{custom-call.9} parent=1 // loop_header
      %s81 = sphi 0, %s85
      %p82 = scmp.ge.s32.totalorder %s81, 2
    $region26: #{custom-call.9} parent=1 // loop_header_branch
      %84 = sbr.rel (%p82) target = $region30
    $region27: #{custom-call.9} parent=1 // loop_body
      %s86 = smul.addr %s81, 8
      %s87 = scalar_lea.vmem [#allocation8], %s86
      %s88 = smul.u32 %s81, 8
      %v89 = vstv %s88
      %v90 = vadd.s32 %v79, %v89
      %91 = vst [vmem:[%s87] sm:$0xff] %v90
    $region28: #{custom-call.9} parent=1 // loop_footer
      %s85 = sadd.s32 1, %s81
    $region29: #{custom-call.9} parent=1 // loop_footer_branch
      %80 = sbr.rel target = $region25
    $region30: #{custom-call.9} parent=1 // loop_exit
      _
    loop: start=0, step=1, limit=16
    $region31: #{custom-call.9} parent=1 // loop_pre_header
      _
    $region32: #{custom-call.9} parent=1 // loop_header
      %s93 = sphi 0, %s97
      %p94 = scmp.ge.s32.totalorder %s93, 16
    $region33: #{custom-call.9} parent=1 // loop_header_branch
      %96 = sbr.rel (%p94) target = $region37
    $region34: #{custom-call.9} parent=1 // loop_body
      %v98 = vstv %s93
      %v99 = vlaneseq
      %v100 = vshrl.u32 %v99, 7
      %v101 = vmov %v100
      %v102 = vld [vmem:[#allocation1] sm:$0xff]
      %v103 = vand.u32 2147483647, %v102
      %v105 = vstv %s93
      %vm106 = vcmp.ge.s32.totalorder %v101, %v105
      %vm107 = vcmp.lt.s32.totalorder %v101, 16
      %vm108 = vmand %vm106, %vm107
      %vm109 = vcmp.lt.f32.partialorder -inf, %v103
      %vm110 = vmand %vm108, %vm109
      %v111 = vsel %vm110, %v101, %v98
      %v112 = vsel %vm110, %v103, -inf
      %s113 = scalar_lea.vmem [#allocation1], 8
      %v114 = vld [vmem:[%s113] sm:$0xff]
      %v115 = vand.u32 2147483647, %v114
      %v116 = vadd.s32 %v101, 8
      %v117 = vstv %s93
      %vm118 = vcmp.ge.s32.totalorder %v116, %v117
      %vm119 = vcmp.lt.s32.totalorder %v116, 16
      %vm120 = vmand %vm118, %vm119
      %vm121 = vcmp.lt.f32.partialorder %v112, %v115
      %vm122 = vmand %vm120, %vm121
      %v123 = vsel %vm122, %v116, %v111
      %v124 = vsel %vm122, %v115, %v112
      %v125 = vrot.slane %v124, 1
      %v126 = vrot.slane %v123, 1
      %vm127 = vcmp.ge.f32.partialorder %v125, %v124
      %v128 = vsel %vm127, %v125, %v124
      %v129 = vsel %vm127, %v126, %v123
      %v130 = vrot.slane %v125, 1
      %v131 = vrot.slane %v126, 1
      %vm132 = vcmp.ge.f32.partialorder %v130, %v128
      %v133 = vsel %vm132, %v130, %v128
      %v134 = vsel %vm132, %v131, %v129
      %v135 = vrot.slane %v130, 1
      %v136 = vrot.slane %v131, 1
      %vm137 = vcmp.ge.f32.partialorder %v135, %v133
      %v138 = vsel %vm137, %v135, %v133
      %v139 = vsel %vm137, %v136, %v134
      %v140 = vrot.slane %v135, 1
      %v141 = vrot.slane %v136, 1
      %vm142 = vcmp.ge.f32.partialorder %v140, %v138
      %v143 = vsel %vm142, %v140, %v138
      %v144 = vsel %vm142, %v141, %v139
      %v145 = vrot.slane %v140, 1
      %v146 = vrot.slane %v141, 1
      %vm147 = vcmp.ge.f32.partialorder %v145, %v143
      %v148 = vsel %vm147, %v145, %v143
      %v149 = vsel %vm147, %v146, %v144
      %v150 = vrot.slane %v145, 1
      %v151 = vrot.slane %v146, 1
      %vm152 = vcmp.ge.f32.partialorder %v150, %v148
      %v153 = vsel %vm152, %v150, %v148
      %v154 = vsel %vm152, %v151, %v149
      %v155 = vrot.slane %v150, 1
      %v156 = vrot.slane %v151, 1
      %vm157 = vcmp.ge.f32.partialorder %v155, %v153
      %v158 = vsel %vm157, %v155, %v153
      %v159 = vsel %vm157, %v156, %v154
      %s160 = ssub.s32 128, %s93
      %161 = vrot.lane.b32.xlu0 %v159, %s160
      %v162 = vpop.permute.xlu0 %161
      %s163 = vtos %v162
      %v164 = vstv %s93
      %v165 = vlaneseq
      %v166 = vand.u32 %v165, 127
      %vm167 = vcmp.eq.s32.totalorder %v166, %v164
      %v168 = vstv %s163
      %v169 = vld [vmem:[#allocation2] ss:$0 sm:$0xff]
      %v170 = vsel %vm167, %v168, %v169
      %171 = vst [vmem:[#allocation2] sm:$0x1] %v170
      %s172 = scalar_lea.vmem [#allocation1], %s93
      %s173 = scalar_lea.vmem [#allocation1], %s163
      %v174 = vld [vmem:[%s172] ss:$0 sm:$0xff]
      %v175 = vld [vmem:[%s173] ss:$0 sm:$0xff]
      %176 = vst [vmem:[%s173] sm:$0x1] %v174
      %177 = vst [vmem:[%s172] sm:$0x1] %v175
      %s178 = scalar_lea.vmem [#allocation8], %s93
      %s179 = scalar_lea.vmem [#allocation8], %s163
      %v180 = vld [vmem:[%s178] ss:$0 sm:$0xff]
      %v181 = vld [vmem:[%s179] ss:$0 sm:$0xff]
      %182 = vst [vmem:[%s179] sm:$0x1] %v180
      %183 = vst [vmem:[%s178] sm:$0x1] %v181
      %vm184 = vcmp.ne.f32.partialorder %v175, 0.0
      %vm185 = vmand %vm167, %vm184
      %v186 = vsel %vm185, %v175, 1.0
      %v187 = vlaneseq
      %v188 = vand.u32 %v187, 127
      %v189 = vstv %s93
      %vm190 = vcmp.gt.s32.totalorder %v188, %v189
      %v191 = vsel %vm190, %v175, 0.0
      %v192 = vlaneseq
      %v193 = vshrl.u32 %v192, 7
      %v194 = vmov %v193
      %v195 = vld [vmem:[#allocation1] sm:$0xff]
      %v197 = vstv %s93
      %vm198 = vcmp.gt.s32.totalorder %v194, %v197
      %v199 = vsel %vm198, %v186, 1.0
      %v200 = vrcp.pop %v199
      %v201 = vmul.f32 %v195, %v200
      %vm202 = vmand %vm198, %vm167
      %v203 = vsel %vm202, %v201, 0.0
      %204 = vadd.xlane.f32.xlu0 %v203
      %v205 = vpop.xlane.xlu0 %204
      %v206 = vmul.f32 %v205, %v191
      %v207 = vsub.f32 %v201, %v206
      %208 = vst [vmem:[#allocation1] sm:$0xff] %v207
      %s209 = scalar_lea.vmem [#allocation1], 8
      %v210 = vld [vmem:[%s209] sm:$0xff]
      %v211 = vadd.s32 %v194, 8
      %v212 = vstv %s93
      %vm213 = vcmp.gt.s32.totalorder %v211, %v212
      %v214 = vsel %vm213, %v186, 1.0
      %v215 = vrcp.pop %v214
      %v216 = vmul.f32 %v210, %v215
      %vm217 = vmand %vm213, %vm167
      %v218 = vsel %vm217, %v216, 0.0
      %219 = vadd.xlane.f32.xlu0 %v218
      %v220 = vpop.xlane.xlu0 %219
      %v221 = vmul.f32 %v220, %v191
      %v222 = vsub.f32 %v216, %v221
      %223 = vst [vmem:[%s209] sm:$0xff] %v222
    $region35: #{custom-call.9} parent=1 // loop_footer
      %s97 = sadd.s32 1, %s93
    $region36: #{custom-call.9} parent=1 // loop_footer_branch
      %92 = sbr.rel target = $region32
    $region37: #{custom-call.9} parent=1 // loop_exit
      _
    %v224 = vld [vmem:[#allocation8] sm:$0xff]
    %s225 = scalar_lea.vmem [#allocation8], 8
    %v226 = vld [vmem:[%s225] sm:$0xff]
    %s227 = scalar_lea.vmem [#allocation8], 16
    %s228 = scalar_lea.vmem [#allocation8], 24
    %s229 = scalar_lea.vmem [#allocation8], 32
    %s230 = scalar_lea.vmem [#allocation8], 40
    %s231 = scalar_lea.vmem [#allocation8], 48
    %s232 = scalar_lea.vmem [#allocation8], 56
    %s233 = scalar_lea.vmem [#allocation8], 64
    %s234 = scalar_lea.vmem [#allocation8], 72
    %s235 = scalar_lea.vmem [#allocation8], 80
    %s236 = scalar_lea.vmem [#allocation8], 88
    %s237 = scalar_lea.vmem [#allocation8], 96
    %s238 = scalar_lea.vmem [#allocation8], 104
    %s239 = scalar_lea.vmem [#allocation8], 112
    %s240 = scalar_lea.vmem [#allocation8], 120
    %241 = vxpose.xlu0.b32.start [1/16] %v224, 128
    %242 = vxpose.xlu0.b32.cont [2/16] %v226, 128
    %243 = vxpose.xlu0.b32.cont [3/16] 0, 128
    %244 = vxpose.xlu0.b32.cont [4/16] 0, 128
    %245 = vxpose.xlu0.b32.cont [5/16] 0, 128
    %246 = vxpose.xlu0.b32.cont [6/16] 0, 128
    %247 = vxpose.xlu0.b32.cont [7/16] 0, 128
    %248 = vxpose.xlu0.b32.cont [8/16] 0, 128
    %249 = vxpose.xlu0.b32.cont [9/16] 0, 128
    %250 = vxpose.xlu0.b32.cont [10/16] 0, 128
    %251 = vxpose.xlu0.b32.cont [11/16] 0, 128
    %252 = vxpose.xlu0.b32.cont [12/16] 0, 128
    %253 = vxpose.xlu0.b32.cont [13/16] 0, 128
    %254 = vxpose.xlu0.b32.cont [14/16] 0, 128
    %255 = vxpose.xlu0.b32.cont [15/16] 0, 128
    %256 = vxpose.xlu0.b32.end [16/16] 0, 128
    %v257 = vpop.trf.xlu0
    %v258 = vpop.trf.xlu0
    %v259 = vpop.trf.xlu0
    %v260 = vpop.trf.xlu0
    %v261 = vpop.trf.xlu0
    %v262 = vpop.trf.xlu0
    %v263 = vpop.trf.xlu0
    %v264 = vpop.trf.xlu0
    %v265 = vpop.trf.xlu0
    %v266 = vpop.trf.xlu0
    %v267 = vpop.trf.xlu0
    %v268 = vpop.trf.xlu0
    %v269 = vpop.trf.xlu0
    %v270 = vpop.trf.xlu0
    %v271 = vpop.trf.xlu0
    %v272 = vpop.trf.xlu0
    %273 = vst [vmem:[#allocation5] sm:$0x1] %v257
    %s275 = sshll.u32 1, 1
    %s276 = ssub.s32 %s275, 1
    %v278 = vld [vmem:[#allocation2] sm:%s276]
    %s279 = sshll.u32 1, 1
    %s280 = ssub.s32 %s279, 1
    %281 = vst [vmem:[#allocation3] sm:%s280] %v278
    %s283 = sshll.u32 1, 1
    %s284 = ssub.s32 %s283, 1
    %v286 = vld [vmem:[#allocation5] sm:%s284]
    %s287 = sshll.u32 1, 1
    %s288 = ssub.s32 %s287, 1
    %289 = vst [vmem:[#allocation6] sm:%s288] %v286
    %p291 = scmp.gt.s32.totalorder 16, 0
    // Predicated region
    $region38: #{custom-call.9} parent=1 // pred_check
      %p292 = pneg %p291
    $region39: #{custom-call.9} parent=1 // pred_check_branch
      %294 = sbr.rel (%p292) target = $region41
    $region40: #{custom-call.9} parent=1 // pred_region
      %s295 = sshra.s32 16, 3
      %p296 = scmp.gt.s32.totalorder %s295, 0
      // Predicated region
      $region42: #{custom-call.9} parent=40 // pred_check
        %p297 = pneg %p296
      $region43: #{custom-call.9} parent=40 // pred_check_branch
        %299 = sbr.rel (%p297) target = $region45
      $region44: #{custom-call.9} parent=40 // pred_region
        %s300 = ssub.s32 %s295, 1
        %s301 = smul.u32 %s300, 128
        %s302 = sshra.s32 %s301, 4
        %s303 = scalar_lea.vmem [#allocation1], %s302
        %v304 = vld [vmem:[#allocation1] sm:$0xff]
        // While loop
        $region46: #{custom-call.9} parent=44 // loop_pre_header
          _
        $region47: #{custom-call.9} parent=44 // loop_header
          %s305 = sphi [#allocation1], %s327
          %s306 = sphi %s1, %s328
          %v307 = vphi %v304, %v329
          %s308 = ssub.s32 %s303, 64
          %p309 = scmp.gt.s32.totalorder %s305, %s308
        $region48: #{custom-call.9} parent=44 // loop_header_branch
          %311 = sbr.rel (%p309) target = $region52
        $region49: #{custom-call.9} parent=44 // loop_body
          %312 = vst [vmem:[%s306] sm:$0xff] %v307
          %v313 = vld [vmem:[%s305 + $0x8] sm:$0xff]
          %314 = vst [vmem:[%s306 + $0x8] sm:$0xff] %v313
          %v315 = vld [vmem:[%s305 + $0x10] sm:$0xff]
          %316 = vst [vmem:[%s306 + $0x10] sm:$0xff] %v315
          %v317 = vld [vmem:[%s305 + $0x18] sm:$0xff]
          %318 = vst [vmem:[%s306 + $0x18] sm:$0xff] %v317
          %v319 = vld [vmem:[%s305 + $0x20] sm:$0xff]
          %320 = vst [vmem:[%s306 + $0x20] sm:$0xff] %v319
          %v321 = vld [vmem:[%s305 + $0x28] sm:$0xff]
          %322 = vst [vmem:[%s306 + $0x28] sm:$0xff] %v321
          %v323 = vld [vmem:[%s305 + $0x30] sm:$0xff]
          %324 = vst [vmem:[%s306 + $0x30] sm:$0xff] %v323
          %v325 = vld [vmem:[%s305 + $0x38] sm:$0xff]
          %326 = vst [vmem:[%s306 + $0x38] sm:$0xff] %v325
        $region50: #{custom-call.9} parent=44 // loop_footer
          %s327 = scalar_lea.vmem %s305, 64
          %s328 = scalar_lea.vmem %s306, 64
          %v329 = vld [vmem:[%s305 + $0x40] sm:$0xff]
        $region51: #{custom-call.9} parent=44 // loop_footer_branch
          %330 = sbr.rel target = $region47
        $region52: #{custom-call.9} parent=44 // loop_exit
          _
        // While loop
        $region53: #{custom-call.9} parent=44 // loop_pre_header
          _
        $region54: #{custom-call.9} parent=44 // loop_header
          %s331 = sphi %s305, %s339
          %s332 = sphi %s306, %s340
          %v333 = vphi %v307, %v333
          %p334 = scmp.gt.s32.totalorder %s331, %s303
        $region55: #{custom-call.9} parent=44 // loop_header_branch
          %336 = sbr.rel (%p334) target = $region59
        $region56: #{custom-call.9} parent=44 // loop_body
          %v337 = vld [vmem:[%s331] sm:$0xff]
          %338 = vst [vmem:[%s332] sm:$0xff] %v337
        $region57: #{custom-call.9} parent=44 // loop_footer
          %s339 = scalar_lea.vmem %s331, 8
          %s340 = scalar_lea.vmem %s332, 8
        $region58: #{custom-call.9} parent=44 // loop_footer_branch
          %341 = sbr.rel target = $region54
        $region59: #{custom-call.9} parent=44 // loop_exit
          _
      $region45: #{custom-call.9} parent=40 // pred_fallthru
        _
      %s342 = sand.u32 16, 7
      %s343 = sshll.u32 1, %s342
      %s344 = ssub.s32 %s343, 1
      %s345 = smul.u32 %s295, 128
      %s346 = sshra.s32 %s345, 4
      %s347 = scalar_lea.vmem %s1, %s346
      %s348 = smul.u32 %s295, 128
      %s349 = sshra.s32 %s348, 4
      %s350 = scalar_lea.vmem [#allocation1], %s349
      %v351 = vld [vmem:[%s350] sm:%s344]
      %352 = vst [vmem:[%s347] sm:%s344] %v351
    $region41: #{custom-call.9} parent=1 // pred_fallthru
      _
    // Predicated region
    $region60: #{custom-call.9} parent=1 // pred_check
      _
    $region61: #{custom-call.9} parent=1 // pred_check_branch
      %354 = sbr.rel (0) target = $region63
    $region62: #{custom-call.9} parent=1 // pred_region
      %s356 = ssub.s32 16, 16
      %357 = vsyncadd [#allocation4], %s356
      %s358 = sshll.u32 [#allocation3], 4
      %s359 = int_to_ptr.vmem [resolvable:$true] %s358
      %361 = dma.vmem_to_hbm [thread:$0]  %s359, 16, %s2, [#allocation4]
    $region63: #{custom-call.9} parent=1 // pred_fallthru
      _
    // Predicated region
    $region64: #{custom-call.9} parent=1 // pred_check
      _
    $region65: #{custom-call.9} parent=1 // pred_check_branch
      %363 = sbr.rel (0) target = $region67
    $region66: #{custom-call.9} parent=1 // pred_region
      %s365 = ssub.s32 16, 16
      %366 = vsyncadd [#allocation7], %s365
      %s367 = sshll.u32 [#allocation6], 4
      %s368 = int_to_ptr.vmem [resolvable:$true] %s367
      %370 = dma.vmem_to_hbm [thread:$0]  %s368, 16, %s3, [#allocation7]
    $region67: #{custom-call.9} parent=1 // pred_fallthru
      _
    // Predicated region
    $region68: #{custom-call.9} parent=1 // pred_check
      _
    $region69: #{custom-call.9} parent=1 // pred_check_branch
      %372 = sbr.rel (0) target = $region71
    $region70: #{custom-call.9} parent=1 // pred_region
      %373 = dma.done [#allocation4], 16
    $region71: #{custom-call.9} parent=1 // pred_fallthru
      _
    // Predicated region
    $region72: #{custom-call.9} parent=1 // pred_check
      _
    $region73: #{custom-call.9} parent=1 // pred_check_branch
      %375 = sbr.rel (0) target = $region75
    $region74: #{custom-call.9} parent=1 // pred_region
      %376 = dma.done [#allocation7], 16
    $region75: #{custom-call.9} parent=1 // pred_fallthru
      _
    %377 = vsyncpa [#allocation4], 1
    %378 = vsyncpa [#allocation7], 1

// kernel: flow_level_forward.9
$region0: #{flow_level_forward.9}
  #allocation0 [shape = 'u32[]', space=smem, size = 0x4, offset = 0x4, fixed_abs, tag = 'smem constant byte address 0x4 - core index']
  #allocation1 [shape = 'u32[144,128]{1,0:T(1,128)}', space=vmem, size = 0x12000, scoped, tag = 'internal scratch']
  %s0 = inlined_call_operand.vmem [shape: f32[8,128], index: 0, kind: input, shape index: {}]
  %s1 = inlined_call_operand.vmem [shape: f32[8,128], index: 1, kind: input, shape index: {}]
  %s2 = inlined_call_operand.vmem [shape: f32[8,128], index: 2, kind: input, shape index: {}]
  %s3 = inlined_call_operand.vmem [shape: f32[8,128], index: 3, kind: output, shape index: {0}]
  %s4 = inlined_call_operand.vmem [shape: f32[8,1], index: 4, kind: output, shape index: {1}]
  %5 = xla_tuple %s3, %s4
  %s6 = sld [smem:[#allocation0]]
  $region30: #{flow_level_forward.9} parent=0
    _
  %s8 = ssub.s32 1, %s6
  %s9 = scalar_select 0, %s8, %s6
  // Predicated region
  $region2: #{flow_level_forward.9} parent=0 // pred_check
    _
  $region3: #{flow_level_forward.9} parent=0 // pred_check_branch
    %11 = sbr.rel (0) target = $region5
  $region4: #{flow_level_forward.9} parent=0 // pred_region
    _
  $region5: #{flow_level_forward.9} parent=0 // pred_fallthru
    _
  // Predicated region
  $region6: #{flow_level_forward.9} parent=0 // pred_check
    _
  $region7: #{flow_level_forward.9} parent=0 // pred_check_branch
    %13 = sbr.rel (0) target = $region9
  $region8: #{flow_level_forward.9} parent=0 // pred_region
    _
  $region9: #{flow_level_forward.9} parent=0 // pred_fallthru
    _
  // Predicated region
  $region10: #{flow_level_forward.9} parent=0 // pred_check
    _
  $region11: #{flow_level_forward.9} parent=0 // pred_check_branch
    %15 = sbr.rel (0) target = $region13
  $region12: #{flow_level_forward.9} parent=0 // pred_region
    _
  $region13: #{flow_level_forward.9} parent=0 // pred_fallthru
    _
  %v16 = vld [vmem:[%s2] sm:$0xff]
  %v17 = vld [vmem:[%s0] sm:$0xff]
  %v18 = vld [vmem:[%s1] sm:$0xff]
  %v19 = vsub.f32 %v17, %v18
  %v20 = vsub.f32 0.0, %v16
  %v21 = vmul.f32 %v20, 1.442695
  %v22 = vpow.pop %v21
  %v23 = vmul.f32 %v19, %v22
  %24 = vst [vmem:[%s3] sm:$0xff] %v23
  %25 = vadd.xlane.f32.xlu0 %v16
  %v26 = vpop.xlane.xlu0 %25
  %v27 = vsub.f32 0.0, %v26
  %vm28 = vcmask 7168
  %29 = vst.msk [vmem:[%s4] sm:$0xff] %vm28, %v27
  // Predicated region
  $region14: #{flow_level_forward.9} parent=0 // pred_check
    _
  $region15: #{flow_level_forward.9} parent=0 // pred_check_branch
    %31 = sbr.rel (0) target = $region17
  $region16: #{flow_level_forward.9} parent=0 // pred_region
    _
  $region17: #{flow_level_forward.9} parent=0 // pred_fallthru
    _
  // Predicated region
  $region18: #{flow_level_forward.9} parent=0 // pred_check
    _
  $region19: #{flow_level_forward.9} parent=0 // pred_check_branch
    %33 = sbr.rel (0) target = $region21
  $region20: #{flow_level_forward.9} parent=0 // pred_region
    _
  $region21: #{flow_level_forward.9} parent=0 // pred_fallthru
    _
  // Predicated region
  $region22: #{flow_level_forward.9} parent=0 // pred_check
    _
  $region23: #{flow_level_forward.9} parent=0 // pred_check_branch
    %35 = sbr.rel (0) target = $region25
  $region24: #{flow_level_forward.9} parent=0 // pred_region
    _
  $region25: #{flow_level_forward.9} parent=0 // pred_fallthru
    _
  // Predicated region
  $region26: #{flow_level_forward.9} parent=0 // pred_check
    _
  $region27: #{flow_level_forward.9} parent=0 // pred_check_branch
    %37 = sbr.rel (0) target = $region29
  $region28: #{flow_level_forward.9} parent=0 // pred_region
    _
  $region29: #{flow_level_forward.9} parent=0 // pred_fallthru
    _

</llo_original>
